<compile_context>
chip_gen: v5e
topology: v5e:2x2
jax: 0.10.0
libtpu: 0.0.40
codegen_flags: <defaults>
</compile_context>

<pallas_src>
import functools

import jax
import jax.numpy as jnp
from jax import lax
from jax.experimental import pallas as pl
from jax.experimental.pallas import tpu as pltpu


def _round_up(x, m):
    return (x + m - 1) // m * m


def _cdiv(a, b):
    return (a + b - 1) // b


def _d_constraint1_kernel(d_ref, out_ref, *, tm, w, m2, spc, chunk):
    """Accumulate per-column sums of squares into an (8, w) f32 output block."""
    c = pl.program_id(0)          # core split        ("parallel")
    s = pl.program_id(1)          # row tile in split ("arbitrary", reduction)

    @pl.when(s == 0)
    def _init():
        out_ref[...] = jnp.zeros_like(out_ref)

    t = c * spc + s               # global (unclamped) row-tile index
    valid = m2 - t * tm           # number of real rows in this tile
    nchunks = tm // chunk

    def _accumulate(mask_rows):
        def body(k, acc):
            off = pl.multiple_of(k * chunk, chunk)
            blk = d_ref[pl.ds(off, chunk), :].astype(jnp.float32)
            if mask_rows:
                rows = lax.broadcasted_iota(jnp.int32, (chunk, w), 0) + off
                blk = jnp.where(rows < valid, blk, 0.0)
            # (chunk, w) -> (chunk//8, 8, w) is layout-free; sum over axis 0 is
            # pure VALU vreg adds into a single (8, w) carry (one vreg-row).
            return acc + (blk * blk).reshape(chunk // 8, 8, w).sum(axis=0)

        out_ref[...] += lax.fori_loop(0, nchunks, body,
                                      jnp.zeros((8, w), jnp.float32))

    # Hot path: full tile, no masking (vld + vmul + vadd only).
    @pl.when(valid >= tm)
    def _full():
        _accumulate(mask_rows=False)

    # Cold path: ragged last tile -- out-of-bounds rows of the partial block are
    # undefined, so zero them before squaring.
    @pl.when(jnp.logical_and(valid > 0, valid < tm))
    def _partial():
        _accumulate(mask_rows=True)
    # valid <= 0: clamped overflow tile of an uneven core split -> contributes nothing.


def d_constraint1(d, *, target_buffer_bytes=8 * 1024 * 1024):
    """Pallas implementation of D_constraint1.forward(d).  Returns an f32 scalar."""
    m, n = d.shape

    # Lane-dense packing: fold r consecutive rows into the lane axis.  r is the
    # largest divisor of m that is <= 128 // n, so the repack is a pure reshape
    # (bitcast) -- no pad / slice copy of d, hence no extra HBM round trip.
    r = 1
    for cand in range(max(1, 128 // max(n, 1)), 0, -1):
        if m % cand == 0:
            r = cand
            break
    m2 = m // r
    w = r * n
    d2 = d.reshape(m2, w)

    # Row tile sized by bytes (dtype aware): ~target_buffer_bytes per pipelined
    # input buffer; 2x double buffering stays well under the 32 MiB scoped VMEM
    # limit requested below on every TPU generation (incl. v7x's 64 MiB/TC).
    itemsize = jnp.dtype(d.dtype).itemsize
    padded_w = _round_up(w, 128)                       # VMEM lanes are 128 wide
    budget_rows = max(8, target_buffer_bytes // (padded_w * itemsize))
    chunk_rows = 256                                   # inner-loop slab size
    if budget_rows >= chunk_rows:
        tm = min((budget_rows // chunk_rows) * chunk_rows,
                 _round_up(m2, chunk_rows))
        chunk = chunk_rows
    else:
        tm = max(8, min((budget_rows // 8) * 8, _round_up(m2, 8)))
        chunk = tm

    total_tiles = _cdiv(m2, tm)
    num_splits = 2 if total_tiles >= 2 else 1          # use both TCs on v7x
    spc = _cdiv(total_tiles, num_splits)               # row tiles per split

    kernel = functools.partial(_d_constraint1_kernel,
                               tm=tm, w=w, m2=m2, spc=spc, chunk=chunk)

    partial_sums = pl.pallas_call(
        kernel,
        out_shape=jax.ShapeDtypeStruct((num_splits * 8, w), jnp.float32),
        grid=(num_splits, spc),
        in_specs=[pl.BlockSpec(
            (tm, w),
            # Clamp so an uneven split never requests a fully out-of-bounds
            # block; the kernel masks such overflow tiles (valid <= 0) to zero.
            lambda c, s: (jnp.minimum(c * spc + s, total_tiles - 1), 0))],
        out_specs=pl.BlockSpec((8, w), lambda c, s: (c, 0)),
        compiler_params=pltpu.CompilerParams(
            dimension_semantics=("parallel", "arbitrary"),
            vmem_limit_bytes=32 * 1024 * 1024),
    )(d2)

    # Tiny finalize in plain JAX: fold splits/sublanes, fold the r lane groups
    # back onto the n true columns, then 0.001 * || diag(d^T d) - 1 ||_2.
    col_sq = jnp.sum(partial_sums, axis=0)             # (w,)
    diag = jnp.sum(col_sq.reshape(r, n), axis=0)       # (n,) = diag(d^T d)
    diff = diag - 1.0
    return 0.001 * jnp.sqrt(jnp.sum(diff * diff))


def _reference(d):
    d = d.astype(jnp.float32)
    n = d.shape[1]
    I = jnp.eye(n, dtype=jnp.float32)
    g = jnp.dot(d.T, d, precision=lax.Precision.HIGHEST)
    return 0.001 * jnp.sqrt(jnp.sum((g * I - I) ** 2))


if __name__ == "__main__":
    key = jax.random.PRNGKey(0)
    k1, k2, k3, k4 = jax.random.split(key, 4)

    # Small case matching the module: 16 rows, 8 columns to orthonormalize.
    d_small = jax.random.normal(k1, (16, 8), dtype=jnp.float32)
    out = jax.block_until_ready(d_constraint1(d_small))
    ref = jax.block_until_ready(_reference(d_small))
    assert jnp.allclose(out, ref, rtol=1e-5, atol=1e-6), (out, ref)

    # Taller case: single tile, ragged (masked) rows.
    d_tall = jax.random.normal(k2, (2048, 8), dtype=jnp.float32)
    out = jax.block_until_ready(d_constraint1(d_tall))
    ref = jax.block_until_ready(_reference(d_tall))
    assert jnp.allclose(out, ref, rtol=1e-4, atol=1e-5), (out, ref)

    # Multi-tile case with a tiny buffer budget: exercises the 2-way core split,
    # accumulation across the "arbitrary" axis, the ragged last tile and the
    # clamped overflow tile of the uneven split.
    d_grid = jax.random.normal(k3, (4800, 8), dtype=jnp.float32)
    out = jax.block_until_ready(d_constraint1(d_grid, target_buffer_bytes=64 * 1024))
    ref = jax.block_until_ready(_reference(d_grid))
    assert jnp.allclose(out, ref, rtol=1e-4, atol=1e-5), (out, ref)

    # Packed lane width not a multiple of 128 (r = 10, w = 80) + bf16 input.
    d_odd = jax.random.normal(k4, (1000, 8), dtype=jnp.float32).astype(jnp.bfloat16)
    out = jax.block_until_ready(d_constraint1(d_odd, target_buffer_bytes=64 * 1024))
    ref = jax.block_until_ready(_reference(d_odd))
    assert jnp.allclose(out, ref, rtol=1e-3, atol=1e-4), (out, ref)

    print("KERNEL_OK")
</pallas_src>

<mosaic_0001>
module attributes {stable_mosaic.version = 11 : i64} {
  func.func @_d_constraint1_kernel(%arg0: i32, %arg1: i32, %arg2: memref<256x128xf32, #tpu.memory_space<vmem>>, %arg3: memref<8x128xf32, #tpu.memory_space<vmem>>) attributes {dimension_semantics = [#tpu.dimension_semantics<parallel>, #tpu.dimension_semantics<arbitrary>], iteration_bounds = array<i64: 1, 1>, scalar_prefetch = 0 : i64, scratch_operands = 0 : i64, tpu.core_type = #tpu.core_type<tc>, window_params = [{transform_indices = @transform_0, window_bounds = array<i64: 256, 128>}, {transform_indices = @transform_1, window_bounds = array<i64: 8, 128>}]} {
    %c0_i32 = arith.constant 0 : i32
    %0 = arith.cmpi eq, %arg1, %c0_i32 : i32
    %1 = arith.extui %0 : i1 to i32
    %c0_i32_0 = arith.constant 0 : i32
    %2 = arith.cmpi ne, %1, %c0_i32_0 : i32
    scf.if %2 {
      %cst = arith.constant 0.000000e+00 : f32
      %15 = vector.broadcast %cst : f32 to vector<8x128xf32>
      %c0 = arith.constant 0 : index
      %c0_7 = arith.constant 0 : index
      %16 = vector.load %arg3[%c0, %c0_7] : memref<8x128xf32, #tpu.memory_space<vmem>>, vector<8x128xf32>
      tpu.vector_store %arg3[%c0, %c0_7], %15 {strides = array<i32>} : memref<8x128xf32, #tpu.memory_space<vmem>>, vector<8x128xf32>,
    } else {
    }
    %c1_i32 = arith.constant 1 : i32
    %3 = arith.muli %arg0, %c1_i32 : i32
    %4 = arith.addi %3, %arg1 : i32
    %c256_i32 = arith.constant 256 : i32
    %5 = arith.muli %4, %c256_i32 : i32
    %c1_i32_1 = arith.constant 1 : i32
    %6 = arith.subi %c1_i32_1, %5 : i32
    %c256_i32_2 = arith.constant 256 : i32
    %7 = arith.cmpi sge, %6, %c256_i32_2 : i32
    %8 = arith.extui %7 : i1 to i32
    %c0_i32_3 = arith.constant 0 : i32
    %9 = arith.cmpi ne, %8, %c0_i32_3 : i32
    scf.if %9 {
      %c0 = arith.constant 0 : index
      %c0_7 = arith.constant 0 : index
      %15 = vector.load %arg3[%c0, %c0_7] : memref<8x128xf32, #tpu.memory_space<vmem>>, vector<8x128xf32>
      %cst = arith.constant 0.000000e+00 : f32
      %16 = vector.broadcast %cst : f32 to vector<8x128xf32>
      %c0_i32_8 = arith.constant 0 : i32
      %c256_i32_9 = arith.constant 256 : i32
      %17 = arith.muli %c0_i32_8, %c256_i32_9 : i32
      %18 = tpu.assume_multiple %17, 256 : i32
      %19 = arith.index_cast %18 : i32 to index
      %c0_10 = arith.constant 0 : index
      %20 = vector.load %arg2[%19, %c0_10] : memref<256x128xf32, #tpu.memory_space<vmem>>, vector<256x128xf32>
      %21 = arith.mulf %20, %20 : vector<256x128xf32>
      %22 = vector.shape_cast %21 : vector<256x128xf32> to vector<32x8x128xf32>
      %cst_11 = arith.constant dense<0.000000e+00> : vector<8x128xf32>
      %23 = vector.multi_reduction <add>, %22, %cst_11 [0] : vector<32x8x128xf32> to vector<8x128xf32>
      %24 = arith.addf %16, %23 : vector<8x128xf32>
      %c1_i32_12 = arith.constant 1 : i32
      %25 = arith.addf %15, %24 : vector<8x128xf32>
      %c0_13 = arith.constant 0 : index
      %c0_14 = arith.constant 0 : index
      %26 = vector.load %arg3[%c0_13, %c0_14] : memref<8x128xf32, #tpu.memory_space<vmem>>, vector<8x128xf32>
      tpu.vector_store %arg3[%c0_13, %c0_14], %25 {strides = array<i32>} : memref<8x128xf32, #tpu.memory_space<vmem>>, vector<8x128xf32>,
    } else {
    }
    %c0_i32_4 = arith.constant 0 : i32
    %10 = arith.cmpi sgt, %6, %c0_i32_4 : i32
    %c256_i32_5 = arith.constant 256 : i32
    %11 = arith.cmpi slt, %6, %c256_i32_5 : i32
    %12 = arith.andi %10, %11 : i1
    %13 = arith.extui %12 : i1 to i32
    %c0_i32_6 = arith.constant 0 : i32
    %14 = arith.cmpi ne, %13, %c0_i32_6 : i32
    scf.if %14 {
      %c0 = arith.constant 0 : index
      %c0_7 = arith.constant 0 : index
      %15 = vector.load %arg3[%c0, %c0_7] : memref<8x128xf32, #tpu.memory_space<vmem>>, vector<8x128xf32>
      %cst = arith.constant 0.000000e+00 : f32
      %16 = vector.broadcast %cst : f32 to vector<8x128xf32>
      %c0_i32_8 = arith.constant 0 : i32
      %c256_i32_9 = arith.constant 256 : i32
      %17 = arith.muli %c0_i32_8, %c256_i32_9 : i32
      %18 = tpu.assume_multiple %17, 256 : i32
      %19 = arith.index_cast %18 : i32 to index
      %c0_10 = arith.constant 0 : index
      %20 = vector.load %arg2[%19, %c0_10] : memref<256x128xf32, #tpu.memory_space<vmem>>, vector<256x128xf32>
      %21 = tpu.iota {dimensions = array<i32: 0>} : vector<256x128xi32>
      %22 = vector.broadcast %18 : i32 to vector<256x128xi32>
      %23 = arith.addi %21, %22 : vector<256x128xi32>
      %24 = vector.broadcast %6 : i32 to vector<256x128xi32>
      %25 = arith.cmpi slt, %23, %24 : vector<256x128xi32>
      %cst_11 = arith.constant 0.000000e+00 : f32
      %26 = vector.broadcast %cst_11 : f32 to vector<256x128xf32>
      %27 = arith.select %25, %20, %26 : vector<256x128xi1>, vector<256x128xf32>
      %28 = arith.mulf %27, %27 : vector<256x128xf32>
      %29 = vector.shape_cast %28 : vector<256x128xf32> to vector<32x8x128xf32>
      %cst_12 = arith.constant dense<0.000000e+00> : vector<8x128xf32>
      %30 = vector.multi_reduction <add>, %29, %cst_12 [0] : vector<32x8x128xf32> to vector<8x128xf32>
      %31 = arith.addf %16, %30 : vector<8x128xf32>
      %c1_i32_13 = arith.constant 1 : i32
      %32 = arith.addf %15, %31 : vector<8x128xf32>
      %c0_14 = arith.constant 0 : index
      %c0_15 = arith.constant 0 : index
      %33 = vector.load %arg3[%c0_14, %c0_15] : memref<8x128xf32, #tpu.memory_space<vmem>>, vector<8x128xf32>
      tpu.vector_store %arg3[%c0_14, %c0_15], %32 {strides = array<i32>} : memref<8x128xf32, #tpu.memory_space<vmem>>, vector<8x128xf32>,
    } else {
    }
    return
  }
  func.func @transform_0(%arg0: i32, %arg1: i32) -> (i32, i32) {
    %c1_i32 = arith.constant 1 : i32
    %0 = arith.muli %arg0, %c1_i32 : i32
    %1 = arith.addi %0, %arg1 : i32
    %c0_i32 = arith.constant 0 : i32
    %2 = arith.minsi %1, %c0_i32 : i32
    %c0_i32_0 = arith.constant 0 : i32
    %c0_i32_1 = arith.constant 0 : i32
    return %2, %c0_i32_0 : i32, i32
  }
  func.func @transform_1(%arg0: i32, %arg1: i32) -> (i32, i32) {
    %c0_i32 = arith.constant 0 : i32
    %c0_i32_0 = arith.constant 0 : i32
    return %arg0, %c0_i32 : i32, i32
  }
}

</mosaic_0001>

<llo_original>
// kernel: tpu_custom_call.1
$region0: #{tpu_custom_call.1}
  #allocation0 [shape = 'u32[]', space=smem, size = 0x4, offset = 0x4, fixed_abs, tag = 'smem constant byte address 0x4 - core index']
  #allocation1 [shape = 'u32[72,128]{1,0:T(1,128)}', space=vmem, size = 0x9000, scoped, tag = 'internal scratch']
  %s0 = inlined_call_operand.hbm [shape: f32[1,128], index: 0, kind: input, shape index: {}]
  %s1 = inlined_call_operand.hbm [shape: f32[8,128], index: 1, kind: output, shape index: {}]
  %s2 = sld [smem:[#allocation0]]
  $region30: #{tpu_custom_call.1} parent=0
    _
  %s4 = ssub.s32 1, %s2
  %s5 = scalar_select 0, %s4, %s2
  $region1: #{tpu_custom_call.1} parent=0
    #allocation2 [shape = 'u8[131072]{0}', space=vmem, size = 0x20000, scoped, tag = 'input window, operand 0, single buffered']
    #allocation3 [shape = 's32[1]{0}', space=sflag, size = 0x4, scoped, tag = 'scoped memory for tpu_custom_call.1']
    #allocation4 [shape = 's32[1]{0}', space=sflag, size = 0x4, scoped, tag = 'scoped memory for tpu_custom_call.1']
    #allocation5 [shape = 'u8[4096]{0}', space=vmem, size = 0x1000, scoped, tag = 'output window, operand 0, single buffered']
    %6 = vsyncpa [#allocation3], 0
    %7 = vsyncpa [#allocation4], 0
    // Predicated region
    $region2: #{tpu_custom_call.1} parent=1 // pred_check
      _
    $region3: #{tpu_custom_call.1} parent=1 // pred_check_branch
      %9 = sbr.rel (0) target = $region5
    $region4: #{tpu_custom_call.1} parent=1 // pred_region
      %s10 = sadd.s32 0, 0
      %p11 = scmp.lt.s32.totalorder %s10, 0
      %s12 = scalar_select %p11, %s10, 0
      %s13 = smul.u32 256, %s12
      %s14 = ssub.s32 1, %s13
      %s15 = ssub.s32 256, %s14
      %s16 = sshll.u32 %s15, 4
      %17 = vsyncadd [#allocation3], %s16
      %p18 = scmp.ne.s32.totalorder 0, %s14
      %s19 = scalar_lea.hbm %s0, %s13
      %s20 = sshll.u32 %s19, 4
      %s21 = int_to_ptr.hbm [resolvable:$true] %s20
      %s22 = sshll.u32 [#allocation2], 4
      %s23 = int_to_ptr.vmem [resolvable:$true] %s22
      %s24 = sshll.u32 %s14, 4
      %28 = dma.hbm_to_vmem [thread:$0]  (%p18), %s21, %s24, %s23, [#allocation3], 16, 16, 1
    $region5: #{tpu_custom_call.1} parent=1 // pred_fallthru
      _
    // Predicated region
    $region6: #{tpu_custom_call.1} parent=1 // pred_check
      _
    $region7: #{tpu_custom_call.1} parent=1 // pred_check_branch
      %30 = sbr.rel (0) target = $region9
    $region8: #{tpu_custom_call.1} parent=1 // pred_region
      %32 = dma.done [#allocation3], 4096
    $region9: #{tpu_custom_call.1} parent=1 // pred_fallthru
      _
    %s33 = sadd.s32 0, 0
    %p34 = scmp.lt.s32.totalorder %s33, 0
    %s35 = scalar_select %p34, %s33, 0
    %s36 = smul.u32 256, %s35
    %s37 = ssub.s32 1, %s36
    %p38 = scmp.eq.s32.totalorder 0, 0
    // Predicated region
    $region10: #{tpu_custom_call.1} parent=1 // pred_check
      %p39 = pneg %p38
    $region11: #{tpu_custom_call.1} parent=1 // pred_check_branch
      %41 = sbr.rel (%p39) target = $region13
    $region12: #{tpu_custom_call.1} parent=1 // pred_region
      %42 = vst [vmem:[#allocation5] sm:$0xff] 0.0
    $region13: #{tpu_custom_call.1} parent=1 // pred_fallthru
      _
    %s43 = sadd.s32 0, 0
    %s44 = smul.u32 %s43, 256
    %s45 = ssub.s32 1, %s44
    %p46 = scmp.ge.s32.totalorder %s45, 256
    // Predicated region
    $region14: #{tpu_custom_call.1} parent=1 // pred_check
      %p47 = pneg %p46
    $region15: #{tpu_custom_call.1} parent=1 // pred_check_branch
      %49 = sbr.rel (%p47) target = $region17
    $region16: #{tpu_custom_call.1} parent=1 // pred_region
      %v50 = vld [vmem:[#allocation5] sm:$0xff]
      %v51 = vld [vmem:[#allocation2] sm:$0xff]
      %v52 = vld [vmem:[#allocation2 + $0x8] sm:$0xff]
      %v53 = vld [vmem:[#allocation2 + $0x10] sm:$0xff]
      %v54 = vld [vmem:[#allocation2 + $0x18] sm:$0xff]
      %v55 = vld [vmem:[#allocation2 + $0x20] sm:$0xff]
      %v56 = vld [vmem:[#allocation2 + $0x28] sm:$0xff]
      %v57 = vld [vmem:[#allocation2 + $0x30] sm:$0xff]
      %v58 = vld [vmem:[#allocation2 + $0x38] sm:$0xff]
      %v59 = vld [vmem:[#allocation2 + $0x40] sm:$0xff]
      %v60 = vld [vmem:[#allocation2 + $0x48] sm:$0xff]
      %v61 = vld [vmem:[#allocation2 + $0x50] sm:$0xff]
      %v62 = vld [vmem:[#allocation2 + $0x58] sm:$0xff]
      %v63 = vld [vmem:[#allocation2 + $0x60] sm:$0xff]
      %v64 = vld [vmem:[#allocation2 + $0x68] sm:$0xff]
      %v65 = vld [vmem:[#allocation2 + $0x70] sm:$0xff]
      %v66 = vld [vmem:[#allocation2 + $0x78] sm:$0xff]
      %v67 = vld [vmem:[#allocation2 + $0x80] sm:$0xff]
      %v68 = vld [vmem:[#allocation2 + $0x88] sm:$0xff]
      %v69 = vld [vmem:[#allocation2 + $0x90] sm:$0xff]
      %v70 = vld [vmem:[#allocation2 + $0x98] sm:$0xff]
      %v71 = vld [vmem:[#allocation2 + $0xa0] sm:$0xff]
      %v72 = vld [vmem:[#allocation2 + $0xa8] sm:$0xff]
      %v73 = vld [vmem:[#allocation2 + $0xb0] sm:$0xff]
      %v74 = vld [vmem:[#allocation2 + $0xb8] sm:$0xff]
      %v75 = vld [vmem:[#allocation2 + $0xc0] sm:$0xff]
      %v76 = vld [vmem:[#allocation2 + $0xc8] sm:$0xff]
      %v77 = vld [vmem:[#allocation2 + $0xd0] sm:$0xff]
      %v78 = vld [vmem:[#allocation2 + $0xd8] sm:$0xff]
      %v79 = vld [vmem:[#allocation2 + $0xe0] sm:$0xff]
      %v80 = vld [vmem:[#allocation2 + $0xe8] sm:$0xff]
      %v81 = vld [vmem:[#allocation2 + $0xf0] sm:$0xff]
      %v82 = vld [vmem:[#allocation2 + $0xf8] sm:$0xff]
      %v83 = vmul.f32 %v51, %v51
      %v84 = vmul.f32 %v52, %v52
      %v85 = vmul.f32 %v53, %v53
      %v86 = vmul.f32 %v54, %v54
      %v87 = vmul.f32 %v55, %v55
      %v88 = vmul.f32 %v56, %v56
      %v89 = vmul.f32 %v57, %v57
      %v90 = vmul.f32 %v58, %v58
      %v91 = vmul.f32 %v59, %v59
      %v92 = vmul.f32 %v60, %v60
      %v93 = vmul.f32 %v61, %v61
      %v94 = vmul.f32 %v62, %v62
      %v95 = vmul.f32 %v63, %v63
      %v96 = vmul.f32 %v64, %v64
      %v97 = vmul.f32 %v65, %v65
      %v98 = vmul.f32 %v66, %v66
      %v99 = vmul.f32 %v67, %v67
      %v100 = vmul.f32 %v68, %v68
      %v101 = vmul.f32 %v69, %v69
      %v102 = vmul.f32 %v70, %v70
      %v103 = vmul.f32 %v71, %v71
      %v104 = vmul.f32 %v72, %v72
      %v105 = vmul.f32 %v73, %v73
      %v106 = vmul.f32 %v74, %v74
      %v107 = vmul.f32 %v75, %v75
      %v108 = vmul.f32 %v76, %v76
      %v109 = vmul.f32 %v77, %v77
      %v110 = vmul.f32 %v78, %v78
      %v111 = vmul.f32 %v79, %v79
      %v112 = vmul.f32 %v80, %v80
      %v113 = vmul.f32 %v81, %v81
      %v114 = vmul.f32 %v82, %v82
      %v115 = vadd.f32 %v83, %v84
      %v116 = vadd.f32 %v115, %v85
      %v117 = vadd.f32 %v116, %v86
      %v118 = vadd.f32 %v117, %v87
      %v119 = vadd.f32 %v118, %v88
      %v120 = vadd.f32 %v119, %v89
      %v121 = vadd.f32 %v120, %v90
      %v122 = vadd.f32 %v121, %v91
      %v123 = vadd.f32 %v122, %v92
      %v124 = vadd.f32 %v123, %v93
      %v125 = vadd.f32 %v124, %v94
      %v126 = vadd.f32 %v125, %v95
      %v127 = vadd.f32 %v126, %v96
      %v128 = vadd.f32 %v127, %v97
      %v129 = vadd.f32 %v128, %v98
      %v130 = vadd.f32 %v129, %v99
      %v131 = vadd.f32 %v130, %v100
      %v132 = vadd.f32 %v131, %v101
      %v133 = vadd.f32 %v132, %v102
      %v134 = vadd.f32 %v133, %v103
      %v135 = vadd.f32 %v134, %v104
      %v136 = vadd.f32 %v135, %v105
      %v137 = vadd.f32 %v136, %v106
      %v138 = vadd.f32 %v137, %v107
      %v139 = vadd.f32 %v138, %v108
      %v140 = vadd.f32 %v139, %v109
      %v141 = vadd.f32 %v140, %v110
      %v142 = vadd.f32 %v141, %v111
      %v143 = vadd.f32 %v142, %v112
      %v144 = vadd.f32 %v143, %v113
      %v145 = vadd.f32 %v144, %v114
      %v146 = vadd.f32 %v145, 0.0
      %v147 = vadd.f32 %v50, %v146
      %148 = vst [vmem:[#allocation5] sm:$0xff] %v147
    $region17: #{tpu_custom_call.1} parent=1 // pred_fallthru
      _
    %p149 = scmp.gt.s32.totalorder %s45, 0
    %p150 = scmp.lt.s32.totalorder %s45, 256
    %p151 = pnand %p149, %p150
    %p152 = pneg %p151
    // Predicated region
    $region18: #{tpu_custom_call.1} parent=1 // pred_check
      _
    $region19: #{tpu_custom_call.1} parent=1 // pred_check_branch
      %154 = sbr.rel (%p151) target = $region21
    $region20: #{tpu_custom_call.1} parent=1 // pred_region
      %v155 = vld [vmem:[#allocation5] sm:$0xff]
      %v156 = vld [vmem:[#allocation2] sm:$0xff]
      %v157 = vld [vmem:[#allocation2 + $0x8] sm:$0xff]
      %v158 = vld [vmem:[#allocation2 + $0x10] sm:$0xff]
      %v159 = vld [vmem:[#allocation2 + $0x18] sm:$0xff]
      %v160 = vld [vmem:[#allocation2 + $0x20] sm:$0xff]
      %v161 = vld [vmem:[#allocation2 + $0x28] sm:$0xff]
      %v162 = vld [vmem:[#allocation2 + $0x30] sm:$0xff]
      %v163 = vld [vmem:[#allocation2 + $0x38] sm:$0xff]
      %v164 = vld [vmem:[#allocation2 + $0x40] sm:$0xff]
      %v165 = vld [vmem:[#allocation2 + $0x48] sm:$0xff]
      %v166 = vld [vmem:[#allocation2 + $0x50] sm:$0xff]
      %v167 = vld [vmem:[#allocation2 + $0x58] sm:$0xff]
      %v168 = vld [vmem:[#allocation2 + $0x60] sm:$0xff]
      %v169 = vld [vmem:[#allocation2 + $0x68] sm:$0xff]
      %v170 = vld [vmem:[#allocation2 + $0x70] sm:$0xff]
      %v171 = vld [vmem:[#allocation2 + $0x78] sm:$0xff]
      %v172 = vld [vmem:[#allocation2 + $0x80] sm:$0xff]
      %v173 = vld [vmem:[#allocation2 + $0x88] sm:$0xff]
      %v174 = vld [vmem:[#allocation2 + $0x90] sm:$0xff]
      %v175 = vld [vmem:[#allocation2 + $0x98] sm:$0xff]
      %v176 = vld [vmem:[#allocation2 + $0xa0] sm:$0xff]
      %v177 = vld [vmem:[#allocation2 + $0xa8] sm:$0xff]
      %v178 = vld [vmem:[#allocation2 + $0xb0] sm:$0xff]
      %v179 = vld [vmem:[#allocation2 + $0xb8] sm:$0xff]
      %v180 = vld [vmem:[#allocation2 + $0xc0] sm:$0xff]
      %v181 = vld [vmem:[#allocation2 + $0xc8] sm:$0xff]
      %v182 = vld [vmem:[#allocation2 + $0xd0] sm:$0xff]
      %v183 = vld [vmem:[#allocation2 + $0xd8] sm:$0xff]
      %v184 = vld [vmem:[#allocation2 + $0xe0] sm:$0xff]
      %v185 = vld [vmem:[#allocation2 + $0xe8] sm:$0xff]
      %v186 = vld [vmem:[#allocation2 + $0xf0] sm:$0xff]
      %v187 = vld [vmem:[#allocation2 + $0xf8] sm:$0xff]
      %v188 = vlaneseq
      %v189 = vshrl.u32 %v188, 7
      %v190 = vadd.s32 %v189, 8
      %v191 = vadd.s32 %v189, 16
      %v192 = vadd.s32 %v189, 24
      %v193 = vadd.s32 %v189, 32
      %v194 = vadd.s32 %v189, 40
      %v195 = vadd.s32 %v189, 48
      %v196 = vadd.s32 %v189, 56
      %v197 = vadd.s32 %v189, 64
      %v198 = vadd.s32 %v189, 72
      %v199 = vadd.s32 %v189, 80
      %v200 = vadd.s32 %v189, 88
      %v201 = vadd.s32 %v189, 96
      %v202 = vadd.s32 %v189, 104
      %v203 = vadd.s32 %v189, 112
      %v204 = vadd.s32 %v189, 120
      %v205 = vadd.s32 %v189, 128
      %v206 = vadd.s32 %v189, 136
      %v207 = vadd.s32 %v189, 144
      %v208 = vadd.s32 %v189, 152
      %v209 = vadd.s32 %v189, 160
      %v210 = vadd.s32 %v189, 168
      %v211 = vadd.s32 %v189, 176
      %v212 = vadd.s32 %v189, 184
      %v213 = vadd.s32 %v189, 192
      %v214 = vadd.s32 %v189, 200
      %v215 = vadd.s32 %v189, 208
      %v216 = vadd.s32 %v189, 216
      %v217 = vadd.s32 %v189, 224
      %v218 = vadd.s32 %v189, 232
      %v219 = vadd.s32 %v189, 240
      %v220 = vadd.s32 %v189, 248
      %v221 = vstv 0
      %v222 = vadd.s32 %v189, %v221
      %v223 = vadd.s32 %v190, %v221
      %v224 = vadd.s32 %v191, %v221
      %v225 = vadd.s32 %v192, %v221
      %v226 = vadd.s32 %v193, %v221
      %v227 = vadd.s32 %v194, %v221
      %v228 = vadd.s32 %v195, %v221
      %v229 = vadd.s32 %v196, %v221
      %v230 = vadd.s32 %v197, %v221
      %v231 = vadd.s32 %v198, %v221
      %v232 = vadd.s32 %v199, %v221
      %v233 = vadd.s32 %v200, %v221
      %v234 = vadd.s32 %v201, %v221
      %v235 = vadd.s32 %v202, %v221
      %v236 = vadd.s32 %v203, %v221
      %v237 = vadd.s32 %v204, %v221
      %v238 = vadd.s32 %v205, %v221
      %v239 = vadd.s32 %v206, %v221
      %v240 = vadd.s32 %v207, %v221
      %v241 = vadd.s32 %v208, %v221
      %v242 = vadd.s32 %v209, %v221
      %v243 = vadd.s32 %v210, %v221
      %v244 = vadd.s32 %v211, %v221
      %v245 = vadd.s32 %v212, %v221
      %v246 = vadd.s32 %v213, %v221
      %v247 = vadd.s32 %v214, %v221
      %v248 = vadd.s32 %v215, %v221
      %v249 = vadd.s32 %v216, %v221
      %v250 = vadd.s32 %v217, %v221
      %v251 = vadd.s32 %v218, %v221
      %v252 = vadd.s32 %v219, %v221
      %v253 = vadd.s32 %v220, %v221
      %v254 = vstv %s45
      %vm255 = vcmp.lt.s32.totalorder %v222, %v254
      %vm256 = vcmp.lt.s32.totalorder %v223, %v254
      %vm257 = vcmp.lt.s32.totalorder %v224, %v254
      %vm258 = vcmp.lt.s32.totalorder %v225, %v254
      %vm259 = vcmp.lt.s32.totalorder %v226, %v254
      %vm260 = vcmp.lt.s32.totalorder %v227, %v254
      %vm261 = vcmp.lt.s32.totalorder %v228, %v254
      %vm262 = vcmp.lt.s32.totalorder %v229, %v254
      %vm263 = vcmp.lt.s32.totalorder %v230, %v254
      %vm264 = vcmp.lt.s32.totalorder %v231, %v254
      %vm265 = vcmp.lt.s32.totalorder %v232, %v254
      %vm266 = vcmp.lt.s32.totalorder %v233, %v254
      %vm267 = vcmp.lt.s32.totalorder %v234, %v254
      %vm268 = vcmp.lt.s32.totalorder %v235, %v254
      %vm269 = vcmp.lt.s32.totalorder %v236, %v254
      %vm270 = vcmp.lt.s32.totalorder %v237, %v254
      %vm271 = vcmp.lt.s32.totalorder %v238, %v254
      %vm272 = vcmp.lt.s32.totalorder %v239, %v254
      %vm273 = vcmp.lt.s32.totalorder %v240, %v254
      %vm274 = vcmp.lt.s32.totalorder %v241, %v254
      %vm275 = vcmp.lt.s32.totalorder %v242, %v254
      %vm276 = vcmp.lt.s32.totalorder %v243, %v254
      %vm277 = vcmp.lt.s32.totalorder %v244, %v254
      %vm278 = vcmp.lt.s32.totalorder %v245, %v254
      %vm279 = vcmp.lt.s32.totalorder %v246, %v254
      %vm280 = vcmp.lt.s32.totalorder %v247, %v254
      %vm281 = vcmp.lt.s32.totalorder %v248, %v254
      %vm282 = vcmp.lt.s32.totalorder %v249, %v254
      %vm283 = vcmp.lt.s32.totalorder %v250, %v254
      %vm284 = vcmp.lt.s32.totalorder %v251, %v254
      %vm285 = vcmp.lt.s32.totalorder %v252, %v254
      %vm286 = vcmp.lt.s32.totalorder %v253, %v254
      %v287 = vsel %vm255, %v156, 0.0
      %v288 = vsel %vm256, %v157, 0.0
      %v289 = vsel %vm257, %v158, 0.0
      %v290 = vsel %vm258, %v159, 0.0
      %v291 = vsel %vm259, %v160, 0.0
      %v292 = vsel %vm260, %v161, 0.0
      %v293 = vsel %vm261, %v162, 0.0
      %v294 = vsel %vm262, %v163, 0.0
      %v295 = vsel %vm263, %v164, 0.0
      %v296 = vsel %vm264, %v165, 0.0
      %v297 = vsel %vm265, %v166, 0.0
      %v298 = vsel %vm266, %v167, 0.0
      %v299 = vsel %vm267, %v168, 0.0
      %v300 = vsel %vm268, %v169, 0.0
      %v301 = vsel %vm269, %v170, 0.0
      %v302 = vsel %vm270, %v171, 0.0
      %v303 = vsel %vm271, %v172, 0.0
      %v304 = vsel %vm272, %v173, 0.0
      %v305 = vsel %vm273, %v174, 0.0
      %v306 = vsel %vm274, %v175, 0.0
      %v307 = vsel %vm275, %v176, 0.0
      %v308 = vsel %vm276, %v177, 0.0
      %v309 = vsel %vm277, %v178, 0.0
      %v310 = vsel %vm278, %v179, 0.0
      %v311 = vsel %vm279, %v180, 0.0
      %v312 = vsel %vm280, %v181, 0.0
      %v313 = vsel %vm281, %v182, 0.0
      %v314 = vsel %vm282, %v183, 0.0
      %v315 = vsel %vm283, %v184, 0.0
      %v316 = vsel %vm284, %v185, 0.0
      %v317 = vsel %vm285, %v186, 0.0
      %v318 = vsel %vm286, %v187, 0.0
      %v319 = vmul.f32 %v287, %v287
      %v320 = vmul.f32 %v288, %v288
      %v321 = vmul.f32 %v289, %v289
      %v322 = vmul.f32 %v290, %v290
      %v323 = vmul.f32 %v291, %v291
      %v324 = vmul.f32 %v292, %v292
      %v325 = vmul.f32 %v293, %v293
      %v326 = vmul.f32 %v294, %v294
      %v327 = vmul.f32 %v295, %v295
      %v328 = vmul.f32 %v296, %v296
      %v329 = vmul.f32 %v297, %v297
      %v330 = vmul.f32 %v298, %v298
      %v331 = vmul.f32 %v299, %v299
      %v332 = vmul.f32 %v300, %v300
      %v333 = vmul.f32 %v301, %v301
      %v334 = vmul.f32 %v302, %v302
      %v335 = vmul.f32 %v303, %v303
      %v336 = vmul.f32 %v304, %v304
      %v337 = vmul.f32 %v305, %v305
      %v338 = vmul.f32 %v306, %v306
      %v339 = vmul.f32 %v307, %v307
      %v340 = vmul.f32 %v308, %v308
      %v341 = vmul.f32 %v309, %v309
      %v342 = vmul.f32 %v310, %v310
      %v343 = vmul.f32 %v311, %v311
      %v344 = vmul.f32 %v312, %v312
      %v345 = vmul.f32 %v313, %v313
      %v346 = vmul.f32 %v314, %v314
      %v347 = vmul.f32 %v315, %v315
      %v348 = vmul.f32 %v316, %v316
      %v349 = vmul.f32 %v317, %v317
      %v350 = vmul.f32 %v318, %v318
      %v351 = vadd.f32 %v319, %v320
      %v352 = vadd.f32 %v351, %v321
      %v353 = vadd.f32 %v352, %v322
      %v354 = vadd.f32 %v353, %v323
      %v355 = vadd.f32 %v354, %v324
      %v356 = vadd.f32 %v355, %v325
      %v357 = vadd.f32 %v356, %v326
      %v358 = vadd.f32 %v357, %v327
      %v359 = vadd.f32 %v358, %v328
      %v360 = vadd.f32 %v359, %v329
      %v361 = vadd.f32 %v360, %v330
      %v362 = vadd.f32 %v361, %v331
      %v363 = vadd.f32 %v362, %v332
      %v364 = vadd.f32 %v363, %v333
      %v365 = vadd.f32 %v364, %v334
      %v366 = vadd.f32 %v365, %v335
      %v367 = vadd.f32 %v366, %v336
      %v368 = vadd.f32 %v367, %v337
      %v369 = vadd.f32 %v368, %v338
      %v370 = vadd.f32 %v369, %v339
      %v371 = vadd.f32 %v370, %v340
      %v372 = vadd.f32 %v371, %v341
      %v373 = vadd.f32 %v372, %v342
      %v374 = vadd.f32 %v373, %v343
      %v375 = vadd.f32 %v374, %v344
      %v376 = vadd.f32 %v375, %v345
      %v377 = vadd.f32 %v376, %v346
      %v378 = vadd.f32 %v377, %v347
      %v379 = vadd.f32 %v378, %v348
      %v380 = vadd.f32 %v379, %v349
      %v381 = vadd.f32 %v380, %v350
      %v382 = vadd.f32 %v381, 0.0
      %v383 = vadd.f32 %v155, %v382
      %384 = vst [vmem:[#allocation5] sm:$0xff] %v383
    $region21: #{tpu_custom_call.1} parent=1 // pred_fallthru
      _
    // Predicated region
    $region22: #{tpu_custom_call.1} parent=1 // pred_check
      _
    $region23: #{tpu_custom_call.1} parent=1 // pred_check_branch
      %386 = sbr.rel (0) target = $region25
    $region24: #{tpu_custom_call.1} parent=1 // pred_region
      %388 = vsyncadd [#allocation4], 0
      %s390 = sshll.u32 [#allocation5], 4
      %s391 = int_to_ptr.vmem [resolvable:$true] %s390
      %s392 = sshll.u32 %s1, 4
      %s393 = int_to_ptr.hbm [resolvable:$true] %s392
      %395 = dma.vmem_to_hbm [thread:$0]  %s391, 128, %s393, [#allocation4]
    $region25: #{tpu_custom_call.1} parent=1 // pred_fallthru
      _
    // Predicated region
    $region26: #{tpu_custom_call.1} parent=1 // pred_check
      _
    $region27: #{tpu_custom_call.1} parent=1 // pred_check_branch
      %397 = sbr.rel (0) target = $region29
    $region28: #{tpu_custom_call.1} parent=1 // pred_region
      %399 = dma.done [#allocation4], 128
    $region29: #{tpu_custom_call.1} parent=1 // pred_fallthru
      _
    %400 = vsyncpa [#allocation3], 1
    %401 = vsyncpa [#allocation4], 1

</llo_original>
